<compile_context>
chip_gen: v7x
topology: tpu7x:2x2x1
jax: 0.10.0
libtpu: 0.0.40
codegen_flags: <defaults>
</compile_context>

<pallas_src>
import jax
import jax.numpy as jnp
import numpy as np
from jax import lax
from jax.experimental import pallas as pl
from jax.experimental.pallas import tpu as pltpu

INPUT_DIM = 130
PADDED_DIM = 256          # 130 zero-padded up to a lane-aligned width
HIDDEN = [256, 128, 64]
BN_EPS = 1e-5

# NT dot_general: contract last dim of lhs with last dim of rhs (splash-attention style).
_NT_DIMS = (((1,), (1,)), ((), ()))


def mlp_kernel(x_ref,
               w1_ref, b1_ref,
               w2_ref, b2_ref,
               w3_ref, b3_ref,
               w4_ref, b4_ref,
               o_ref):
    cdt = w2_ref.dtype  # bf16 (or f32) compute dtype for MXU operands

    # Layer 1: Linear -> ReLU   (BN1 already folded into W2/b2)
    h = jnp.dot(x_ref[...], w1_ref[...], preferred_element_type=jnp.float32) + b1_ref[...]
    h = jnp.maximum(h, 0.0)
    # Layer 2: Linear -> ReLU   (BN2 folded into W3/b3)
    h = jnp.dot(h.astype(cdt), w2_ref[...], preferred_element_type=jnp.float32) + b2_ref[...]
    h = jnp.maximum(h, 0.0)
    # Layer 3: Linear -> ReLU   (BN3 folded into W4/b4)
    h = jnp.dot(h.astype(cdt), w3_ref[...], preferred_element_type=jnp.float32) + b3_ref[...]
    h = jnp.maximum(h, 0.0)

    # Output head: lane-dense.  w4_ref is the (replicated x8) head weight row, shape (8, 64).
    # NT matmul: (8, 64) x (tile_b, 64) -> (8, tile_b); all 8 rows identical.
    head = lax.dot_general(w4_ref[...], h.astype(cdt), _NT_DIMS,
                           preferred_element_type=jnp.float32)
    logits = head + b4_ref[...]            # (8, tile_b) + (1, 1)
    o_ref[0] = jax.nn.sigmoid(logits)      # write full (8, tile_b) slab (row 0 is the answer)


def _fold_bn(gamma, beta, mean, var):
    scale = gamma / jnp.sqrt(var + BN_EPS)
    shift = beta - mean * scale
    return scale, shift


def prepare_params(params, *, use_bf16=True):
    """Exact eval-mode BN fold + feature padding + head-row replication + dtype cast."""
    (w1, b1, g1, be1, m1, v1,
     w2, b2, g2, be2, m2, v2,
     w3, b3, g3, be3, m3, v3,
     w4, b4) = params

    s1, t1 = _fold_bn(g1, be1, m1, v1)
    s2, t2 = _fold_bn(g2, be2, m2, v2)
    s3, t3 = _fold_bn(g3, be3, m3, v3)

    # BN after layer k applies y = relu_out * s + t; fold exactly into layer k+1:
    #   (y) @ W = relu_out @ (s[:, None] * W) + (t @ W)
    w2f = s1[:, None] * w2
    b2f = (t1 @ w2 + b2)
    w3f = s2[:, None] * w3
    b3f = (t2 @ w3 + b3)
    w4f = s3[:, None] * w4          # (64, 1)
    b4f = (t3 @ w4 + b4)            # (1, 1)

    # Zero-pad W1 rows 130 -> 256 (matches zero-padded x columns; mathematically exact).
    w1p = jnp.pad(w1, ((0, PADDED_DIM - INPUT_DIM), (0, 0)))

    # Head weight as a lane-dense row, replicated to 8 sublanes so the head matmul has M=8.
    w4row = jnp.tile(w4f.reshape(1, -1), (8, 1))    # (8, 64)

    cdt = jnp.bfloat16 if use_bf16 else jnp.float32
    return (w1p.astype(cdt), b1.astype(jnp.float32),
            w2f.astype(cdt), b2f.astype(jnp.float32),
            w3f.astype(cdt), b3f.astype(jnp.float32),
            w4row.astype(cdt), b4f.astype(jnp.float32))


def jane_street_nn_pallas(x, params, *, tile_b=512, use_bf16=True):
    B, F = x.shape
    assert F == INPUT_DIM

    tile_b = max(8, (int(tile_b) // 8) * 8)         # keep a multiple of 8 sublanes
    Bp = ((B + tile_b - 1) // tile_b) * tile_b      # pad batch; slice output later
    n_tiles = Bp // tile_b

    (w1p, b1, w2f, b2f, w3f, b3f, w4row, b4f) = prepare_params(params, use_bf16=use_bf16)
    cdt = w1p.dtype
    x_p = jnp.pad(x, ((0, Bp - B), (0, PADDED_DIM - F))).astype(cdt)

    def full_spec(arr):
        return pl.BlockSpec(arr.shape, lambda i: (0, 0))

    in_specs = [
        pl.BlockSpec((tile_b, PADDED_DIM), lambda i: (i, 0)),   # streamed activations
        full_spec(w1p), full_spec(b1),
        full_spec(w2f), full_spec(b2f),
        full_spec(w3f), full_spec(b3f),
        full_spec(w4row), full_spec(b4f),
    ]

    # Lane-dense output: one (8, tile_b) slab per grid step (rows identical); wrapper
    # keeps row 0.  Block shape trivially satisfies the (8, 128)/full-dim constraints.
    out = pl.pallas_call(
        mlp_kernel,
        out_shape=jax.ShapeDtypeStruct((n_tiles, 8, tile_b), jnp.float32),
        grid_spec=pltpu.PrefetchScalarGridSpec(
            num_scalar_prefetch=0,
            grid=(n_tiles,),
            in_specs=in_specs,
            out_specs=pl.BlockSpec((1, 8, tile_b), lambda i: (i, 0, 0)),
        ),
        compiler_params=pltpu.CompilerParams(
            dimension_semantics=("parallel",)),   # megacore-shardable on v7x
        # NOTE: for very large tile_b (>~4K) set vmem_limit_bytes and consider
        # pipeline_mode=pl.Buffered(3) on the x BlockSpec.
    )(x_p, w1p, b1, w2f, b2f, w3f, b3f, w4row, b4f)

    return out[:, 0, :].reshape(Bp, 1)[:B]


def init_params(key):
    """PyTorch-style init. Linear: U(+-1/sqrt(fan_in)); BN params randomized so the
    general (gamma, beta, running_mean, running_var) fold is actually exercised."""
    dims = [INPUT_DIM] + HIDDEN + [1]
    keys = jax.random.split(key, 6 * len(HIDDEN) + 2)
    params = []
    ki = 0
    for li in range(len(dims) - 1):
        fan_in, fan_out = dims[li], dims[li + 1]
        bound = 1.0 / np.sqrt(fan_in)
        w = jax.random.uniform(keys[ki], (fan_in, fan_out), minval=-bound, maxval=bound,
                               dtype=jnp.float32); ki += 1
        b = jax.random.uniform(keys[ki], (1, fan_out), minval=-bound, maxval=bound,
                               dtype=jnp.float32); ki += 1
        params.extend([w, b])
        if li < len(HIDDEN):
            gamma = jax.random.uniform(keys[ki], (fan_out,), minval=0.5, maxval=1.5,
                                       dtype=jnp.float32); ki += 1
            beta = 0.1 * jax.random.normal(keys[ki], (fan_out,), dtype=jnp.float32); ki += 1
            rmean = 0.1 * jax.random.normal(keys[ki], (fan_out,), dtype=jnp.float32); ki += 1
            rvar = jax.random.uniform(keys[ki], (fan_out,), minval=0.5, maxval=1.5,
                                      dtype=jnp.float32); ki += 1
            params.extend([gamma, beta, rmean, rvar])
    return params


def jane_street_nn_ref(x, params):
    """Pure-JAX f32 reference matching PyTorch eval-mode semantics."""
    (w1, b1, g1, be1, m1, v1,
     w2, b2, g2, be2, m2, v2,
     w3, b3, g3, be3, m3, v3,
     w4, b4) = params
    h = jnp.maximum(x @ w1 + b1, 0.0)
    h = (h - m1) / jnp.sqrt(v1 + BN_EPS) * g1 + be1
    h = jnp.maximum(h @ w2 + b2, 0.0)
    h = (h - m2) / jnp.sqrt(v2 + BN_EPS) * g2 + be2
    h = jnp.maximum(h @ w3 + b3, 0.0)
    h = (h - m3) / jnp.sqrt(v3 + BN_EPS) * g3 + be3
    return jax.nn.sigmoid(h @ w4 + b4)


if __name__ == "__main__":
    key = jax.random.PRNGKey(0)
    k_x, k_p = jax.random.split(key)

    B = 20  # small, deliberately not a multiple of the tile -> exercises batch padding
    x = jax.random.normal(k_x, (B, INPUT_DIM), dtype=jnp.float32)
    params = init_params(k_p)
    ref = jane_street_nn_ref(x, params)

    # f32 path: exact-math check (BN fold / feature pad / head replication are exact).
    out_f32 = jax.block_until_ready(
        jane_street_nn_pallas(x, params, tile_b=8, use_bf16=False))
    np.testing.assert_allclose(np.asarray(out_f32), np.asarray(ref), rtol=1e-4, atol=1e-4)

    # bf16 MXU path (production config on v6e/v7x): looser tolerance.
    out_bf16 = jax.block_until_ready(
        jane_street_nn_pallas(x, params, tile_b=8, use_bf16=True))
    np.testing.assert_allclose(np.asarray(out_bf16), np.asarray(ref), rtol=3e-2, atol=3e-2)

    assert out_f32.shape == (B, 1) and out_bf16.shape == (B, 1)
    print("KERNEL_OK")
</pallas_src>

<mosaic_0001>
module attributes {stable_mosaic.version = 11 : i64} {
  func.func @mlp_kernel(%arg0: i32, %arg1: memref<8x256xf32, #tpu.memory_space<vmem>>, %arg2: memref<256x256xf32, #tpu.memory_space<vmem>>, %arg3: memref<1x256xf32, #tpu.memory_space<vmem>>, %arg4: memref<256x128xf32, #tpu.memory_space<vmem>>, %arg5: memref<1x128xf32, #tpu.memory_space<vmem>>, %arg6: memref<128x64xf32, #tpu.memory_space<vmem>>, %arg7: memref<1x64xf32, #tpu.memory_space<vmem>>, %arg8: memref<8x64xf32, #tpu.memory_space<vmem>>, %arg9: memref<1x1xf32, #tpu.memory_space<vmem>>, %arg10: memref<1x8x8xf32, #tpu.memory_space<vmem>>) attributes {dimension_semantics = [#tpu.dimension_semantics<parallel>], iteration_bounds = array<i64: 3>, scalar_prefetch = 0 : i64, scratch_operands = 0 : i64, tpu.core_type = #tpu.core_type<tc>, window_params = [{transform_indices = @transform_0, window_bounds = array<i64: 8, 256>}, {pipeline_mode = #tpu.pipeline_mode<synchronous>, transform_indices = @transform_1, window_bounds = array<i64: 256, 256>}, {pipeline_mode = #tpu.pipeline_mode<synchronous>, transform_indices = @transform_2, window_bounds = array<i64: 1, 256>}, {pipeline_mode = #tpu.pipeline_mode<synchronous>, transform_indices = @transform_3, window_bounds = array<i64: 256, 128>}, {pipeline_mode = #tpu.pipeline_mode<synchronous>, transform_indices = @transform_4, window_bounds = array<i64: 1, 128>}, {pipeline_mode = #tpu.pipeline_mode<synchronous>, transform_indices = @transform_5, window_bounds = array<i64: 128, 64>}, {pipeline_mode = #tpu.pipeline_mode<synchronous>, transform_indices = @transform_6, window_bounds = array<i64: 1, 64>}, {pipeline_mode = #tpu.pipeline_mode<synchronous>, transform_indices = @transform_7, window_bounds = array<i64: 8, 64>}, {pipeline_mode = #tpu.pipeline_mode<synchronous>, transform_indices = @transform_8, window_bounds = array<i64: 1, 1>}, {transform_indices = @transform_9, window_bounds = array<i64: 1, 8, 8>}]} {
    %c0 = arith.constant 0 : index
    %c0_0 = arith.constant 0 : index
    %0 = vector.load %arg1[%c0, %c0_0] : memref<8x256xf32, #tpu.memory_space<vmem>>, vector<8x256xf32>
    %c0_1 = arith.constant 0 : index
    %c0_2 = arith.constant 0 : index
    %1 = vector.load %arg2[%c0_1, %c0_2] : memref<256x256xf32, #tpu.memory_space<vmem>>, vector<256x256xf32>
    %cst = arith.constant dense<0.000000e+00> : vector<8x256xf32>
    %2 = tpu.matmul %0, %1, %cst {dimension_numbers = #tpu.dot_dimension_numbers<[1], [0], [0], [1], [0, 0, 1, 1], [], []>} : vector<8x256xf32>, vector<256x256xf32>, vector<8x256xf32> -> vector<8x256xf32>
    %c0_3 = arith.constant 0 : index
    %c0_4 = arith.constant 0 : index
    %3 = vector.load %arg3[%c0_3, %c0_4] : memref<1x256xf32, #tpu.memory_space<vmem>>, vector<1x256xf32>
    %4 = vector.broadcast %3 : vector<1x256xf32> to vector<8x256xf32>
    %5 = arith.addf %2, %4 : vector<8x256xf32>
    %cst_5 = arith.constant 0.000000e+00 : f32
    %6 = vector.broadcast %cst_5 : f32 to vector<8x256xf32>
    %7 = arith.maximumf %5, %6 : vector<8x256xf32>
    %c0_6 = arith.constant 0 : index
    %c0_7 = arith.constant 0 : index
    %8 = vector.load %arg4[%c0_6, %c0_7] : memref<256x128xf32, #tpu.memory_space<vmem>>, vector<256x128xf32>
    %cst_8 = arith.constant dense<0.000000e+00> : vector<8x128xf32>
    %9 = tpu.matmul %7, %8, %cst_8 {dimension_numbers = #tpu.dot_dimension_numbers<[1], [0], [0], [1], [0, 0, 1, 1], [], []>} : vector<8x256xf32>, vector<256x128xf32>, vector<8x128xf32> -> vector<8x128xf32>
    %c0_9 = arith.constant 0 : index
    %c0_10 = arith.constant 0 : index
    %10 = vector.load %arg5[%c0_9, %c0_10] : memref<1x128xf32, #tpu.memory_space<vmem>>, vector<1x128xf32>
    %11 = vector.broadcast %10 : vector<1x128xf32> to vector<8x128xf32>
    %12 = arith.addf %9, %11 : vector<8x128xf32>
    %cst_11 = arith.constant 0.000000e+00 : f32
    %13 = vector.broadcast %cst_11 : f32 to vector<8x128xf32>
    %14 = arith.maximumf %12, %13 : vector<8x128xf32>
    %c0_12 = arith.constant 0 : index
    %c0_13 = arith.constant 0 : index
    %15 = vector.load %arg6[%c0_12, %c0_13] : memref<128x64xf32, #tpu.memory_space<vmem>>, vector<128x64xf32>
    %cst_14 = arith.constant dense<0.000000e+00> : vector<8x64xf32>
    %16 = tpu.matmul %14, %15, %cst_14 {dimension_numbers = #tpu.dot_dimension_numbers<[1], [0], [0], [1], [0, 0, 1, 1], [], []>} : vector<8x128xf32>, vector<128x64xf32>, vector<8x64xf32> -> vector<8x64xf32>
    %c0_15 = arith.constant 0 : index
    %c0_16 = arith.constant 0 : index
    %17 = vector.load %arg7[%c0_15, %c0_16] : memref<1x64xf32, #tpu.memory_space<vmem>>, vector<1x64xf32>
    %18 = vector.broadcast %17 : vector<1x64xf32> to vector<8x64xf32>
    %19 = arith.addf %16, %18 : vector<8x64xf32>
    %cst_17 = arith.constant 0.000000e+00 : f32
    %20 = vector.broadcast %cst_17 : f32 to vector<8x64xf32>
    %21 = arith.maximumf %19, %20 : vector<8x64xf32>
    %c0_18 = arith.constant 0 : index
    %c0_19 = arith.constant 0 : index
    %22 = vector.load %arg8[%c0_18, %c0_19] : memref<8x64xf32, #tpu.memory_space<vmem>>, vector<8x64xf32>
    %cst_20 = arith.constant dense<0.000000e+00> : vector<8x8xf32>
    %23 = tpu.matmul %22, %21, %cst_20 {dimension_numbers = #tpu.dot_dimension_numbers<[1], [1], [0], [0], [0, 0, 1, 0], [], []>} : vector<8x64xf32>, vector<8x64xf32>, vector<8x8xf32> -> vector<8x8xf32>
    %c0_21 = arith.constant 0 : index
    %c0_22 = arith.constant 0 : index
    %24 = vector.load %arg9[%c0_21, %c0_22] : memref<1x1xf32, #tpu.memory_space<vmem>>, vector<1x1xf32>
    %25 = vector.broadcast %24 : vector<1x1xf32> to vector<8x8xf32>
    %26 = arith.addf %23, %25 : vector<8x8xf32>
    %27 = arith.negf %26 : vector<8x8xf32>
    %28 = math.exp %27 : vector<8x8xf32>
    %cst_23 = arith.constant 1.000000e+00 : f32
    %29 = vector.broadcast %cst_23 : f32 to vector<8x8xf32>
    %30 = arith.addf %29, %28 : vector<8x8xf32>
    %31 = arith.divf %29, %30 : vector<8x8xf32>
    %c0_24 = arith.constant 0 : index
    %c0_25 = arith.constant 0 : index
    %c0_26 = arith.constant 0 : index
    %32 = vector.load %arg10[%c0_24, %c0_25, %c0_26] : memref<1x8x8xf32, #tpu.memory_space<vmem>>, vector<1x8x8xf32>
    %33 = vector.shape_cast %32 : vector<1x8x8xf32> to vector<8x8xf32>
    %34 = vector.shape_cast %31 : vector<8x8xf32> to vector<1x8x8xf32>
    tpu.vector_store %arg10[%c0_24, %c0_25, %c0_26], %34 {strides = array<i32>} : memref<1x8x8xf32, #tpu.memory_space<vmem>>, vector<1x8x8xf32>,
    return
  }
  func.func @transform_0(%arg0: i32) -> (i32, i32) {
    %c0_i32 = arith.constant 0 : i32
    %c0_i32_0 = arith.constant 0 : i32
    return %arg0, %c0_i32 : i32, i32
  }
  func.func @transform_1(%arg0: i32) -> (i32, i32) {
    %c0_i32 = arith.constant 0 : i32
    %c0_i32_0 = arith.constant 0 : i32
    %c0_i32_1 = arith.constant 0 : i32
    return %c0_i32, %c0_i32_0 : i32, i32
  }
  func.func @transform_2(%arg0: i32) -> (i32, i32) {
    %c0_i32 = arith.constant 0 : i32
    %c0_i32_0 = arith.constant 0 : i32
    %c0_i32_1 = arith.constant 0 : i32
    return %c0_i32, %c0_i32_0 : i32, i32
  }
  func.func @transform_3(%arg0: i32) -> (i32, i32) {
    %c0_i32 = arith.constant 0 : i32
    %c0_i32_0 = arith.constant 0 : i32
    %c0_i32_1 = arith.constant 0 : i32
    return %c0_i32, %c0_i32_0 : i32, i32
  }
  func.func @transform_4(%arg0: i32) -> (i32, i32) {
    %c0_i32 = arith.constant 0 : i32
    %c0_i32_0 = arith.constant 0 : i32
    %c0_i32_1 = arith.constant 0 : i32
    return %c0_i32, %c0_i32_0 : i32, i32
  }
  func.func @transform_5(%arg0: i32) -> (i32, i32) {
    %c0_i32 = arith.constant 0 : i32
    %c0_i32_0 = arith.constant 0 : i32
    %c0_i32_1 = arith.constant 0 : i32
    return %c0_i32, %c0_i32_0 : i32, i32
  }
  func.func @transform_6(%arg0: i32) -> (i32, i32) {
    %c0_i32 = arith.constant 0 : i32
    %c0_i32_0 = arith.constant 0 : i32
    %c0_i32_1 = arith.constant 0 : i32
    return %c0_i32, %c0_i32_0 : i32, i32
  }
  func.func @transform_7(%arg0: i32) -> (i32, i32) {
    %c0_i32 = arith.constant 0 : i32
    %c0_i32_0 = arith.constant 0 : i32
    %c0_i32_1 = arith.constant 0 : i32
    return %c0_i32, %c0_i32_0 : i32, i32
  }
  func.func @transform_8(%arg0: i32) -> (i32, i32) {
    %c0_i32 = arith.constant 0 : i32
    %c0_i32_0 = arith.constant 0 : i32
    %c0_i32_1 = arith.constant 0 : i32
    return %c0_i32, %c0_i32_0 : i32, i32
  }
  func.func @transform_9(%arg0: i32) -> (i32, i32, i32) {
    %c0_i32 = arith.constant 0 : i32
    %c0_i32_0 = arith.constant 0 : i32
    %c0_i32_1 = arith.constant 0 : i32
    return %arg0, %c0_i32, %c0_i32_0 : i32, i32, i32
  }
}

</mosaic_0001>

<llo_original>
// kernel: tpu_custom_call.1
$region0: #{tpu_custom_call.1}
  #allocation0 [shape = 'u32[]', space=smem, size = 0x4, offset = 0x4, fixed_abs, tag = 'smem constant byte address 0x4 - core index']
  #allocation1 [shape = 'u32[144,128]{1,0:T(1,128)}', space=vmem, size = 0x12000, scoped, tag = 'internal scratch']
  #allocation2 [shape = 'f32[1,1]{1,0:T(1,128)S(1)}', space=vmem, size = 0x200, scoped, tag = 'scoped memory for tpu_custom_call.1']
  %s0 = inlined_call_operand.vmem [shape: f32[24,256], index: 0, kind: input, shape index: {}]
  %s1 = inlined_call_operand.hbm [shape: f32[256,256], index: 1, kind: input, shape index: {}]
  %s2 = inlined_call_operand.vmem [shape: f32[1,256], index: 2, kind: input, shape index: {}]
  %s3 = inlined_call_operand.hbm [shape: f32[256,128], index: 3, kind: input, shape index: {}]
  %s4 = inlined_call_operand.vmem [shape: f32[1,128], index: 4, kind: input, shape index: {}]
  %s5 = inlined_call_operand.vmem [shape: f32[128,64], index: 5, kind: input, shape index: {}]
  %s6 = inlined_call_operand.vmem [shape: f32[1,64], index: 6, kind: input, shape index: {}]
  %s7 = inlined_call_operand.vmem [shape: f32[8,64], index: 7, kind: input, shape index: {}]
  %s8 = inlined_call_operand.<no memory space> [shape: f32[1,1], index: 8, kind: input, shape index: {}]
  %s9 = inlined_call_operand.hbm [shape: f32[3,8,8], index: 9, kind: output, shape index: {}]
  %s10 = sld [smem:[#allocation0]]
  $region77: #{tpu_custom_call.1} parent=0
    _
  %s12 = ssub.s32 1, %s10
  %s13 = scalar_select 0, %s12, %s10
  %v14 = vstv %s8
  %15 = vst [vmem:[#allocation2] sm:$0x1] %v14
  $region1: #{tpu_custom_call.1} parent=0
    #allocation3 [shape = 'u8[262144]{0}', space=vmem, size = 0x40000, scoped, tag = 'input window, operand 1, single buffered']
    #allocation4 [shape = 's32[2]{0}', space=sflag, size = 0x8, scoped, tag = 'scoped memory for tpu_custom_call.1']
    #allocation5 [shape = 's32[2]{0}', space=sflag, size = 0x8, scoped, tag = 'scoped memory for tpu_custom_call.1']
    #allocation6 [shape = 'u8[131072]{0}', space=vmem, size = 0x20000, scoped, tag = 'input window, operand 3, single buffered']
    #allocation7 [shape = 's32[1]{0}', space=sflag, size = 0x4, scoped, tag = 'scoped memory for tpu_custom_call.1']
    #allocation8 [shape = 'u8[8192]{0}', space=vmem, size = 0x2000, scoped, tag = 'output window, operand 0']
    %16 = vsyncpa [#allocation4], 0
    %17 = vsyncpa [#allocation7], 0
    %18 = vsyncpa [#allocation5], 0
    %s19 = scalar_lea.sflag [#allocation5], 1
    %20 = vsyncpa %s19, 0
    loop: start=0, step=1, limit=5
    $region2: #{tpu_custom_call.1} parent=1 // loop_pre_header
      _
    $region3: #{tpu_custom_call.1} parent=1 // loop_header
      %s22 = sphi 0, %s26
      %p23 = scmp.ge.s32.totalorder %s22, 5
      %s32 = sphi 0, %s34
      %s35 = sphi 0, %s32
      %s36 = sphi 0, %s35
      %s52 = sphi 0, %s36
      %s56 = sphi 0, %s56
      %s58 = sphi 0, %s56
      %s59 = sphi 0, %s58
      %s73 = sphi 0, %s59
      %s77 = sphi 0, %s77
      %s79 = sphi 0, %s77
      %s80 = sphi 0, %s79
      %s94 = sphi 0, %s80
      %s98 = sphi 0, %s98
      %s100 = sphi 0, %s98
      %s101 = sphi 0, %s100
      %s115 = sphi 0, %s101
      %s119 = sphi 0, %s119
      %s121 = sphi 0, %s119
      %s122 = sphi 0, %s121
      %s136 = sphi 0, %s122
      %s140 = sphi 0, %s140
      %s142 = sphi 0, %s140
      %s143 = sphi 0, %s142
      %s157 = sphi 0, %s143
      %s161 = sphi 0, %s161
      %s163 = sphi 0, %s161
      %s164 = sphi 0, %s163
      %s178 = sphi 0, %s164
      %s182 = sphi 0, %s182
      %s184 = sphi 0, %s182
      %s185 = sphi 0, %s184
      %s199 = sphi 0, %s185
      %s203 = sphi 0, %s203
      %s205 = sphi 0, %s203
      %s206 = sphi 0, %s205
      %s220 = sphi 0, %s206
      %s226 = sphi 0, %s228
      %s229 = sphi 0, %s226
      %s230 = sphi 0, %s229
      %s246 = sphi 0, %s230
    $region4: #{tpu_custom_call.1} parent=1 // loop_header_branch
      %25 = sbr.rel (%p23) target = $region8
    $region5: #{tpu_custom_call.1} parent=1 // loop_body
      %s27 = ssub.s32 %s22, 1
      %s28 = ssub.s32 %s22, 2
      %s29 = sadd.s32 %s22, 1
      %s30 = ssub.s32 %s22, %s29
      %p31 = scmp.eq.s32.totalorder %s30, 0
      %s33 = sadd.s32 %s32, 1
      %s34 = scalar_select %p31, %s32, %s33
      %p37 = pneg %p31
      %p38 = scmp.eq.s32.totalorder %s22, 2
      %p39 = por %p37, %p38
      %p40 = scmp.ne.s32.totalorder %s32, %s35
      %p41 = scmp.eq.s32.totalorder %s22, 0
      %p42 = por %p40, %p41
      %p43 = scmp.ne.s32.totalorder %s32, %s35
      %p44 = scmp.eq.s32.totalorder %s27, 2
      %p45 = por %p43, %p44
      %p46 = scmp.ne.s32.totalorder %s35, %s36
      %p47 = scmp.eq.s32.totalorder %s27, 0
      %p48 = por %p46, %p47
      %p49 = scmp.ne.s32.totalorder %s35, %s36
      %p50 = scmp.eq.s32.totalorder %s28, 2
      %p51 = por %p49, %p50
      %p53 = scmp.ne.s32.totalorder %s36, %s52
      %p54 = scmp.eq.s32.totalorder %s28, 0
      %p55 = por %p53, %p54
      %s57 = sadd.s32 %s56, 1
      %p60 = scmp.eq.s32.totalorder %s22, 2
      %p61 = scmp.ne.s32.totalorder %s56, %s58
      %p62 = scmp.eq.s32.totalorder %s22, 0
      %p63 = por %p61, %p62
      %p64 = scmp.ne.s32.totalorder %s56, %s58
      %p65 = scmp.eq.s32.totalorder %s27, 2
      %p66 = por %p64, %p65
      %p67 = scmp.ne.s32.totalorder %s58, %s59
      %p68 = scmp.eq.s32.totalorder %s27, 0
      %p69 = por %p67, %p68
      %p70 = scmp.ne.s32.totalorder %s58, %s59
      %p71 = scmp.eq.s32.totalorder %s28, 2
      %p72 = por %p70, %p71
      %p74 = scmp.ne.s32.totalorder %s59, %s73
      %p75 = scmp.eq.s32.totalorder %s28, 0
      %p76 = por %p74, %p75
      %s78 = sadd.s32 %s77, 1
      %p81 = scmp.eq.s32.totalorder %s22, 2
      %p82 = scmp.ne.s32.totalorder %s77, %s79
      %p83 = scmp.eq.s32.totalorder %s22, 0
      %p84 = por %p82, %p83
      %p85 = scmp.ne.s32.totalorder %s77, %s79
      %p86 = scmp.eq.s32.totalorder %s27, 2
      %p87 = por %p85, %p86
      %p88 = scmp.ne.s32.totalorder %s79, %s80
      %p89 = scmp.eq.s32.totalorder %s27, 0
      %p90 = por %p88, %p89
      %p91 = scmp.ne.s32.totalorder %s79, %s80
      %p92 = scmp.eq.s32.totalorder %s28, 2
      %p93 = por %p91, %p92
      %p95 = scmp.ne.s32.totalorder %s80, %s94
      %p96 = scmp.eq.s32.totalorder %s28, 0
      %p97 = por %p95, %p96
      %s99 = sadd.s32 %s98, 1
      %p102 = scmp.eq.s32.totalorder %s22, 2
      %p103 = scmp.ne.s32.totalorder %s98, %s100
      %p104 = scmp.eq.s32.totalorder %s22, 0
      %p105 = por %p103, %p104
      %p106 = scmp.ne.s32.totalorder %s98, %s100
      %p107 = scmp.eq.s32.totalorder %s27, 2
      %p108 = por %p106, %p107
      %p109 = scmp.ne.s32.totalorder %s100, %s101
      %p110 = scmp.eq.s32.totalorder %s27, 0
      %p111 = por %p109, %p110
      %p112 = scmp.ne.s32.totalorder %s100, %s101
      %p113 = scmp.eq.s32.totalorder %s28, 2
      %p114 = por %p112, %p113
      %p116 = scmp.ne.s32.totalorder %s101, %s115
      %p117 = scmp.eq.s32.totalorder %s28, 0
      %p118 = por %p116, %p117
      %s120 = sadd.s32 %s119, 1
      %p123 = scmp.eq.s32.totalorder %s22, 2
      %p124 = scmp.ne.s32.totalorder %s119, %s121
      %p125 = scmp.eq.s32.totalorder %s22, 0
      %p126 = por %p124, %p125
      %p127 = scmp.ne.s32.totalorder %s119, %s121
      %p128 = scmp.eq.s32.totalorder %s27, 2
      %p129 = por %p127, %p128
      %p130 = scmp.ne.s32.totalorder %s121, %s122
      %p131 = scmp.eq.s32.totalorder %s27, 0
      %p132 = por %p130, %p131
      %p133 = scmp.ne.s32.totalorder %s121, %s122
      %p134 = scmp.eq.s32.totalorder %s28, 2
      %p135 = por %p133, %p134
      %p137 = scmp.ne.s32.totalorder %s122, %s136
      %p138 = scmp.eq.s32.totalorder %s28, 0
      %p139 = por %p137, %p138
      %s141 = sadd.s32 %s140, 1
      %p144 = scmp.eq.s32.totalorder %s22, 2
      %p145 = scmp.ne.s32.totalorder %s140, %s142
      %p146 = scmp.eq.s32.totalorder %s22, 0
      %p147 = por %p145, %p146
      %p148 = scmp.ne.s32.totalorder %s140, %s142
      %p149 = scmp.eq.s32.totalorder %s27, 2
      %p150 = por %p148, %p149
      %p151 = scmp.ne.s32.totalorder %s142, %s143
      %p152 = scmp.eq.s32.totalorder %s27, 0
      %p153 = por %p151, %p152
      %p154 = scmp.ne.s32.totalorder %s142, %s143
      %p155 = scmp.eq.s32.totalorder %s28, 2
      %p156 = por %p154, %p155
      %p158 = scmp.ne.s32.totalorder %s143, %s157
      %p159 = scmp.eq.s32.totalorder %s28, 0
      %p160 = por %p158, %p159
      %s162 = sadd.s32 %s161, 1
      %p165 = scmp.eq.s32.totalorder %s22, 2
      %p166 = scmp.ne.s32.totalorder %s161, %s163
      %p167 = scmp.eq.s32.totalorder %s22, 0
      %p168 = por %p166, %p167
      %p169 = scmp.ne.s32.totalorder %s161, %s163
      %p170 = scmp.eq.s32.totalorder %s27, 2
      %p171 = por %p169, %p170
      %p172 = scmp.ne.s32.totalorder %s163, %s164
      %p173 = scmp.eq.s32.totalorder %s27, 0
      %p174 = por %p172, %p173
      %p175 = scmp.ne.s32.totalorder %s163, %s164
      %p176 = scmp.eq.s32.totalorder %s28, 2
      %p177 = por %p175, %p176
      %p179 = scmp.ne.s32.totalorder %s164, %s178
      %p180 = scmp.eq.s32.totalorder %s28, 0
      %p181 = por %p179, %p180
      %s183 = sadd.s32 %s182, 1
      %p186 = scmp.eq.s32.totalorder %s22, 2
      %p187 = scmp.ne.s32.totalorder %s182, %s184
      %p188 = scmp.eq.s32.totalorder %s22, 0
      %p189 = por %p187, %p188
      %p190 = scmp.ne.s32.totalorder %s182, %s184
      %p191 = scmp.eq.s32.totalorder %s27, 2
      %p192 = por %p190, %p191
      %p193 = scmp.ne.s32.totalorder %s184, %s185
      %p194 = scmp.eq.s32.totalorder %s27, 0
      %p195 = por %p193, %p194
      %p196 = scmp.ne.s32.totalorder %s184, %s185
      %p197 = scmp.eq.s32.totalorder %s28, 2
      %p198 = por %p196, %p197
      %p200 = scmp.ne.s32.totalorder %s185, %s199
      %p201 = scmp.eq.s32.totalorder %s28, 0
      %p202 = por %p200, %p201
      %s204 = sadd.s32 %s203, 1
      %p207 = scmp.eq.s32.totalorder %s22, 2
      %p208 = scmp.ne.s32.totalorder %s203, %s205
      %p209 = scmp.eq.s32.totalorder %s22, 0
      %p210 = por %p208, %p209
      %p211 = scmp.ne.s32.totalorder %s203, %s205
      %p212 = scmp.eq.s32.totalorder %s27, 2
      %p213 = por %p211, %p212
      %p214 = scmp.ne.s32.totalorder %s205, %s206
      %p215 = scmp.eq.s32.totalorder %s27, 0
      %p216 = por %p214, %p215
      %p217 = scmp.ne.s32.totalorder %s205, %s206
      %p218 = scmp.eq.s32.totalorder %s28, 2
      %p219 = por %p217, %p218
      %p221 = scmp.ne.s32.totalorder %s206, %s220
      %p222 = scmp.eq.s32.totalorder %s28, 0
      %p223 = por %p221, %p222
      %s224 = ssub.s32 %s22, %s29
      %p225 = scmp.eq.s32.totalorder %s224, 0
      %s227 = sadd.s32 %s226, 1
      %s228 = scalar_select %p225, %s226, %s227
      %p231 = pneg %p225
      %p232 = scmp.eq.s32.totalorder %s22, 2
      %p233 = por %p231, %p232
      %p234 = scmp.ne.s32.totalorder %s226, %s229
      %p235 = scmp.eq.s32.totalorder %s22, 0
      %p236 = por %p234, %p235
      %p237 = scmp.ne.s32.totalorder %s226, %s229
      %p238 = scmp.eq.s32.totalorder %s27, 2
      %p239 = por %p237, %p238
      %p240 = scmp.ne.s32.totalorder %s229, %s230
      %p241 = scmp.eq.s32.totalorder %s27, 0
      %p242 = por %p240, %p241
      %p243 = scmp.ne.s32.totalorder %s229, %s230
      %p244 = scmp.eq.s32.totalorder %s28, 2
      %p245 = por %p243, %p244
      %p247 = scmp.ne.s32.totalorder %s230, %s246
      %p248 = scmp.eq.s32.totalorder %s28, 0
      %p249 = por %p247, %p248
      %p250 = scmp.le.s32.totalorder 1, %s22
      %p251 = scmp.lt.s32.totalorder %s22, 4
      %p252 = pnand %p250, %p251
      %p253 = pneg %p252
      // Predicated region
      $region9: #{tpu_custom_call.1} parent=5 // pred_check
        _
      $region10: #{tpu_custom_call.1} parent=5 // pred_check_branch
        %255 = sbr.rel (%p252) target = $region12
      $region11: #{tpu_custom_call.1} parent=5 // pred_region
        %s256 = ssub.s32 %s22, 1
        // Predicated region
        $region13: #{tpu_custom_call.1} parent=11 // pred_check
          %p257 = pneg %p69
        $region14: #{tpu_custom_call.1} parent=11 // pred_check_branch
          %259 = sbr.rel (%p257) target = $region16
        $region15: #{tpu_custom_call.1} parent=11 // pred_region
          %s261 = ssub.s32 8192, 8192
          %262 = vsyncadd [#allocation4], %s261
          %s263 = sshll.u32 [#allocation3], 4
          %s264 = int_to_ptr.vmem [resolvable:$true] %s263
          %269 = dma.hbm_to_vmem [thread:$0]  %s1, 8192, %s264, [#allocation4], 256, 256, 16
        $region16: #{tpu_custom_call.1} parent=11 // pred_fallthru
          _
        // Predicated region
        $region17: #{tpu_custom_call.1} parent=11 // pred_check
          %p270 = pneg %p90
        $region18: #{tpu_custom_call.1} parent=11 // pred_check_branch
          %272 = sbr.rel (%p270) target = $region20
        $region19: #{tpu_custom_call.1} parent=11 // pred_region
          _
        $region20: #{tpu_custom_call.1} parent=11 // pred_fallthru
          _
        // Predicated region
        $region21: #{tpu_custom_call.1} parent=11 // pred_check
          %p273 = pneg %p111
        $region22: #{tpu_custom_call.1} parent=11 // pred_check_branch
          %275 = sbr.rel (%p273) target = $region24
        $region23: #{tpu_custom_call.1} parent=11 // pred_region
          %s277 = ssub.s32 4096, 4096
          %278 = vsyncadd [#allocation7], %s277
          %s279 = sshll.u32 [#allocation6], 4
          %s280 = int_to_ptr.vmem [resolvable:$true] %s279
          %285 = dma.hbm_to_vmem [thread:$0]  %s3, 4096, %s280, [#allocation7], 128, 128, 8
        $region24: #{tpu_custom_call.1} parent=11 // pred_fallthru
          _
        // Predicated region
        $region25: #{tpu_custom_call.1} parent=11 // pred_check
          %p286 = pneg %p132
        $region26: #{tpu_custom_call.1} parent=11 // pred_check_branch
          %288 = sbr.rel (%p286) target = $region28
        $region27: #{tpu_custom_call.1} parent=11 // pred_region
          _
        $region28: #{tpu_custom_call.1} parent=11 // pred_fallthru
          _
        // Predicated region
        $region29: #{tpu_custom_call.1} parent=11 // pred_check
          %p289 = pneg %p153
        $region30: #{tpu_custom_call.1} parent=11 // pred_check_branch
          %291 = sbr.rel (%p289) target = $region32
        $region31: #{tpu_custom_call.1} parent=11 // pred_region
          _
        $region32: #{tpu_custom_call.1} parent=11 // pred_fallthru
          _
        // Predicated region
        $region33: #{tpu_custom_call.1} parent=11 // pred_check
          %p292 = pneg %p174
        $region34: #{tpu_custom_call.1} parent=11 // pred_check_branch
          %294 = sbr.rel (%p292) target = $region36
        $region35: #{tpu_custom_call.1} parent=11 // pred_region
          _
        $region36: #{tpu_custom_call.1} parent=11 // pred_fallthru
          _
        // Predicated region
        $region37: #{tpu_custom_call.1} parent=11 // pred_check
          %p295 = pneg %p195
        $region38: #{tpu_custom_call.1} parent=11 // pred_check_branch
          %297 = sbr.rel (%p295) target = $region40
        $region39: #{tpu_custom_call.1} parent=11 // pred_region
          _
        $region40: #{tpu_custom_call.1} parent=11 // pred_fallthru
          _
        // Predicated region
        $region41: #{tpu_custom_call.1} parent=11 // pred_check
          %p298 = pneg %p216
        $region42: #{tpu_custom_call.1} parent=11 // pred_check_branch
          %300 = sbr.rel (%p298) target = $region44
        $region43: #{tpu_custom_call.1} parent=11 // pred_region
          _
        $region44: #{tpu_custom_call.1} parent=11 // pred_fallthru
          _
      $region12: #{tpu_custom_call.1} parent=5 // pred_fallthru
        _
      %p301 = scmp.lt.s32.totalorder %s22, 3
      // Predicated region
      $region45: #{tpu_custom_call.1} parent=5 // pred_check
        %p302 = pneg %p301
      $region46: #{tpu_custom_call.1} parent=5 // pred_check_branch
        %304 = sbr.rel (%p302) target = $region48
      $region47: #{tpu_custom_call.1} parent=5 // pred_region
        // Predicated region
        $region49: #{tpu_custom_call.1} parent=47 // pred_check
          %p305 = pneg %p42
        $region50: #{tpu_custom_call.1} parent=47 // pred_check_branch
          %307 = sbr.rel (%p305) target = $region52
        $region51: #{tpu_custom_call.1} parent=47 // pred_region
          %p308 = scmp.lt.s32.totalorder %s22, 2
          %s309 = scalar_select %p308, %s22, 2
          %s310 = smul.addr %s309, 2
          %s311 = smul.addr %s310, 8
          %s312 = scalar_lea.vmem %s0, %s311
        $region52: #{tpu_custom_call.1} parent=47 // pred_fallthru
          _
      $region48: #{tpu_custom_call.1} parent=5 // pred_fallthru
        _
      %p313 = scmp.le.s32.totalorder 1, %s22
      %p314 = scmp.lt.s32.totalorder %s22, 4
      %p315 = pnand %p313, %p314
      %p316 = pneg %p315
      // Predicated region
      $region53: #{tpu_custom_call.1} parent=5 // pred_check
        _
      $region54: #{tpu_custom_call.1} parent=5 // pred_check_branch
        %318 = sbr.rel (%p315) target = $region56
      $region55: #{tpu_custom_call.1} parent=5 // pred_region
        %s319 = ssub.s32 %s22, 1
        // Predicated region
        $region57: #{tpu_custom_call.1} parent=55 // pred_check
          %p320 = pneg %p69
        $region58: #{tpu_custom_call.1} parent=55 // pred_check_branch
          %322 = sbr.rel (%p320) target = $region60
        $region59: #{tpu_custom_call.1} parent=55 // pred_region
          %323 = dma.done [#allocation4], 8192
        $region60: #{tpu_custom_call.1} parent=55 // pred_fallthru
          _
        // Predicated region
        $region61: #{tpu_custom_call.1} parent=55 // pred_check
          %p324 = pneg %p111
        $region62: #{tpu_custom_call.1} parent=55 // pred_check_branch
          %326 = sbr.rel (%p324) target = $region64
        $region63: #{tpu_custom_call.1} parent=55 // pred_region
          %327 = dma.done [#allocation7], 4096
        $region64: #{tpu_custom_call.1} parent=55 // pred_fallthru
          _
        %p328 = scmp.lt.s32.totalorder %s27, 2
        %s329 = scalar_select %p328, %s27, 2
        %s330 = smul.addr %s329, 2
        %s331 = smul.addr %s330, 8
        %s332 = scalar_lea.vmem %s0, %s331
        %p333 = pneg %p48
        %p334 = pneg %p45
        %p335 = pneg %p69
        %p336 = pneg %p66
        %p337 = pneg %p90
        %p338 = pneg %p87
        %p339 = pneg %p111
        %p340 = pneg %p108
        %p341 = pneg %p132
        %p342 = pneg %p129
        %p343 = pneg %p153
        %p344 = pneg %p150
        %p345 = pneg %p174
        %p346 = pneg %p171
        %p347 = pneg %p195
        %p348 = pneg %p192
        %p349 = pneg %p216
        %p350 = pneg %p213
        %p351 = pneg %p242
        %p352 = pneg %p239
        %s353 = sand.u32 %s229, 1
        %s354 = scalar_lea.sflag [#allocation5], %s353
        %s355 = sand.u32 %s229, 1
        %s356 = smul.addr %s355, 8
        %s357 = scalar_lea.vmem [#allocation8], %s356
        %p358 = scmp.lt.s32.totalorder %s27, 2
        %s359 = scalar_select %p358, %s27, 2
        %s360 = smul.addr %s359, 2
        %s361 = smul.addr %s360, 8
        %s362 = scalar_lea.vmem %s0, %s361
        %v363 = vld [vmem:[%s362] sm:$0xff]
        %v364 = vld [vmem:[%s362 + $0x8] sm:$0xff]
        %v365 = vld [vmem:[#allocation3] sm:$0xff]
        %v366 = vld [vmem:[#allocation3 + $0x8] sm:$0xff]
        %v367 = vld [vmem:[#allocation3 + $0x10] sm:$0xff]
        %v368 = vld [vmem:[#allocation3 + $0x18] sm:$0xff]
        %v369 = vld [vmem:[#allocation3 + $0x20] sm:$0xff]
        %v370 = vld [vmem:[#allocation3 + $0x28] sm:$0xff]
        %v371 = vld [vmem:[#allocation3 + $0x30] sm:$0xff]
        %v372 = vld [vmem:[#allocation3 + $0x38] sm:$0xff]
        %v373 = vld [vmem:[#allocation3 + $0x40] sm:$0xff]
        %v374 = vld [vmem:[#allocation3 + $0x48] sm:$0xff]
        %v375 = vld [vmem:[#allocation3 + $0x50] sm:$0xff]
        %v376 = vld [vmem:[#allocation3 + $0x58] sm:$0xff]
        %v377 = vld [vmem:[#allocation3 + $0x60] sm:$0xff]
        %v378 = vld [vmem:[#allocation3 + $0x68] sm:$0xff]
        %v379 = vld [vmem:[#allocation3 + $0x70] sm:$0xff]
        %v380 = vld [vmem:[#allocation3 + $0x78] sm:$0xff]
        %v381 = vld [vmem:[#allocation3 + $0x80] sm:$0xff]
        %v382 = vld [vmem:[#allocation3 + $0x88] sm:$0xff]
        %v383 = vld [vmem:[#allocation3 + $0x90] sm:$0xff]
        %v384 = vld [vmem:[#allocation3 + $0x98] sm:$0xff]
        %v385 = vld [vmem:[#allocation3 + $0xa0] sm:$0xff]
        %v386 = vld [vmem:[#allocation3 + $0xa8] sm:$0xff]
        %v387 = vld [vmem:[#allocation3 + $0xb0] sm:$0xff]
        %v388 = vld [vmem:[#allocation3 + $0xb8] sm:$0xff]
        %v389 = vld [vmem:[#allocation3 + $0xc0] sm:$0xff]
        %v390 = vld [vmem:[#allocation3 + $0xc8] sm:$0xff]
        %v391 = vld [vmem:[#allocation3 + $0xd0] sm:$0xff]
        %v392 = vld [vmem:[#allocation3 + $0xd8] sm:$0xff]
        %v393 = vld [vmem:[#allocation3 + $0xe0] sm:$0xff]
        %v394 = vld [vmem:[#allocation3 + $0xe8] sm:$0xff]
        %v395 = vld [vmem:[#allocation3 + $0xf0] sm:$0xff]
        %v396 = vld [vmem:[#allocation3 + $0xf8] sm:$0xff]
        %v397 = vld [vmem:[#allocation3 + $0x100] sm:$0xff]
        %v398 = vld [vmem:[#allocation3 + $0x108] sm:$0xff]
        %v399 = vld [vmem:[#allocation3 + $0x110] sm:$0xff]
        %v400 = vld [vmem:[#allocation3 + $0x118] sm:$0xff]
        %v401 = vld [vmem:[#allocation3 + $0x120] sm:$0xff]
        %v402 = vld [vmem:[#allocation3 + $0x128] sm:$0xff]
        %v403 = vld [vmem:[#allocation3 + $0x130] sm:$0xff]
        %v404 = vld [vmem:[#allocation3 + $0x138] sm:$0xff]
        %v405 = vld [vmem:[#allocation3 + $0x140] sm:$0xff]
        %v406 = vld [vmem:[#allocation3 + $0x148] sm:$0xff]
        %v407 = vld [vmem:[#allocation3 + $0x150] sm:$0xff]
        %v408 = vld [vmem:[#allocation3 + $0x158] sm:$0xff]
        %v409 = vld [vmem:[#allocation3 + $0x160] sm:$0xff]
        %v410 = vld [vmem:[#allocation3 + $0x168] sm:$0xff]
        %v411 = vld [vmem:[#allocation3 + $0x170] sm:$0xff]
        %v412 = vld [vmem:[#allocation3 + $0x178] sm:$0xff]
        %v413 = vld [vmem:[#allocation3 + $0x180] sm:$0xff]
        %v414 = vld [vmem:[#allocation3 + $0x188] sm:$0xff]
        %v415 = vld [vmem:[#allocation3 + $0x190] sm:$0xff]
        %v416 = vld [vmem:[#allocation3 + $0x198] sm:$0xff]
        %v417 = vld [vmem:[#allocation3 + $0x1a0] sm:$0xff]
        %v418 = vld [vmem:[#allocation3 + $0x1a8] sm:$0xff]
        %v419 = vld [vmem:[#allocation3 + $0x1b0] sm:$0xff]
        %v420 = vld [vmem:[#allocation3 + $0x1b8] sm:$0xff]
        %v421 = vld [vmem:[#allocation3 + $0x1c0] sm:$0xff]
        %v422 = vld [vmem:[#allocation3 + $0x1c8] sm:$0xff]
        %v423 = vld [vmem:[#allocation3 + $0x1d0] sm:$0xff]
        %v424 = vld [vmem:[#allocation3 + $0x1d8] sm:$0xff]
        %v425 = vld [vmem:[#allocation3 + $0x1e0] sm:$0xff]
        %v426 = vld [vmem:[#allocation3 + $0x1e8] sm:$0xff]
        %v427 = vld [vmem:[#allocation3 + $0x1f0] sm:$0xff]
        %v428 = vld [vmem:[#allocation3 + $0x1f8] sm:$0xff]
        %v429 = vld [vmem:[%s2] sm:$0x3]
        %v431 = vlaneseq
        %v432 = vshrl.u32 %v431, 7
        %v433 = vsub.s32 0, %v432
        %v434 = vrot.slane %v429, %v433
        %v435 = vlaneseq
        %v436 = vshrl.u32 %v435, 7
        %v437 = vsub.s32 1, %v436
        %v438 = vrot.slane %v429, %v437
        %441 = vmatprep.subr.mxu0 %v366
        %442 = vmatpush1.msra.mxu0 %v365
        %443 = vmatprep.subr.mxu0 %v368
        %444 = vmatpush1.msra.mxu0 %v367
        %445 = vmatprep.subr.mxu0 %v370
        %446 = vmatpush1.msra.mxu0 %v369
        %447 = vmatprep.subr.mxu0 %v372
        %448 = vmatpush1.msra.mxu0 %v371
        %449 = vmatprep.subr.mxu0 %v374
        %450 = vmatpush1.msra.mxu0 %v373
        %451 = vmatprep.subr.mxu0 %v376
        %452 = vmatpush1.msra.mxu0 %v375
        %453 = vmatprep.subr.mxu0 %v378
        %454 = vmatpush1.msra.mxu0 %v377
        %455 = vmatprep.subr.mxu0 %v380
        %456 = vmatpush1.msra.mxu0 %v379
        %457 = vmatprep.subr.mxu0 %v382
        %458 = vmatpush1.msra.mxu0 %v381
        %459 = vmatprep.subr.mxu0 %v384
        %460 = vmatpush1.msra.mxu0 %v383
        %461 = vmatprep.subr.mxu0 %v386
        %462 = vmatpush1.msra.mxu0 %v385
        %463 = vmatprep.subr.mxu0 %v388
        %464 = vmatpush1.msra.mxu0 %v387
        %465 = vmatprep.subr.mxu0 %v390
        %466 = vmatpush1.msra.mxu0 %v389
        %467 = vmatprep.subr.mxu0 %v392
        %468 = vmatpush1.msra.mxu0 %v391
        %469 = vmatprep.subr.mxu0 %v394
        %470 = vmatpush1.msra.mxu0 %v393
        %471 = vmatprep.subr.mxu0 %v396
        %472 = vmatpush1.msra.mxu0 %v395
        %473 = vmatprep.subr.mxu0 %v398
        %474 = vmatpush1.msra.mxu0 %v397
        %475 = vmatprep.subr.mxu0 %v400
        %476 = vmatpush1.msra.mxu0 %v399
        %477 = vmatprep.subr.mxu0 %v402
        %478 = vmatpush1.msra.mxu0 %v401
        %479 = vmatprep.subr.mxu0 %v404
        %480 = vmatpush1.msra.mxu0 %v403
        %481 = vmatprep.subr.mxu0 %v406
        %482 = vmatpush1.msra.mxu0 %v405
        %483 = vmatprep.subr.mxu0 %v408
        %484 = vmatpush1.msra.mxu0 %v407
        %485 = vmatprep.subr.mxu0 %v410
        %486 = vmatpush1.msra.mxu0 %v409
        %487 = vmatprep.subr.mxu0 %v412
        %488 = vmatpush1.msra.mxu0 %v411
        %489 = vmatprep.subr.mxu0 %v414
        %490 = vmatpush1.msra.mxu0 %v413
        %491 = vmatprep.subr.mxu0 %v416
        %492 = vmatpush1.msra.mxu0 %v415
        %493 = vmatprep.subr.mxu0 %v418
        %494 = vmatpush1.msra.mxu0 %v417
        %495 = vmatprep.subr.mxu0 %v420
        %496 = vmatpush1.msra.mxu0 %v419
        %497 = vmatprep.subr.mxu0 %v422
        %498 = vmatpush1.msra.mxu0 %v421
        %499 = vmatprep.subr.mxu0 %v424
        %500 = vmatpush1.msra.mxu0 %v423
        %501 = vmatprep.subr.mxu0 %v426
        %502 = vmatpush1.msra.mxu0 %v425
        %503 = vmatprep.subr.mxu0 %v428
        %504 = vmatpush1.msra.mxu0 %v427
        %505 = vmatprep.mubr.f32.mxu0 %v364
        %506 = vmatmul.mubr.f32.gmra.mrb[0].mxu0 %v363
        %v507 = vpop.f32.mrb[0].mxu0
        %v508 = vadd.f32 %v434, %v507
        %v509 = vpop.f32.mrb[0].mxu0
        %v510 = vadd.f32 %v438, %v509
        %511 = vdwg.mxu0
        %v512 = vmax.f32 %v508, 0.0
        %v513 = vmax.f32 %v510, 0.0
        %v514 = vld [vmem:[#allocation6] sm:$0xff]
        %v515 = vld [vmem:[#allocation6 + $0x8] sm:$0xff]
        %v516 = vld [vmem:[#allocation6 + $0x10] sm:$0xff]
        %v517 = vld [vmem:[#allocation6 + $0x18] sm:$0xff]
        %v518 = vld [vmem:[#allocation6 + $0x20] sm:$0xff]
        %v519 = vld [vmem:[#allocation6 + $0x28] sm:$0xff]
        %v520 = vld [vmem:[#allocation6 + $0x30] sm:$0xff]
        %v521 = vld [vmem:[#allocation6 + $0x38] sm:$0xff]
        %v522 = vld [vmem:[#allocation6 + $0x40] sm:$0xff]
        %v523 = vld [vmem:[#allocation6 + $0x48] sm:$0xff]
        %v524 = vld [vmem:[#allocation6 + $0x50] sm:$0xff]
        %v525 = vld [vmem:[#allocation6 + $0x58] sm:$0xff]
        %v526 = vld [vmem:[#allocation6 + $0x60] sm:$0xff]
        %v527 = vld [vmem:[#allocation6 + $0x68] sm:$0xff]
        %v528 = vld [vmem:[#allocation6 + $0x70] sm:$0xff]
        %v529 = vld [vmem:[#allocation6 + $0x78] sm:$0xff]
        %v530 = vld [vmem:[#allocation6 + $0x80] sm:$0xff]
        %v531 = vld [vmem:[#allocation6 + $0x88] sm:$0xff]
        %v532 = vld [vmem:[#allocation6 + $0x90] sm:$0xff]
        %v533 = vld [vmem:[#allocation6 + $0x98] sm:$0xff]
        %v534 = vld [vmem:[#allocation6 + $0xa0] sm:$0xff]
        %v535 = vld [vmem:[#allocation6 + $0xa8] sm:$0xff]
        %v536 = vld [vmem:[#allocation6 + $0xb0] sm:$0xff]
        %v537 = vld [vmem:[#allocation6 + $0xb8] sm:$0xff]
        %v538 = vld [vmem:[#allocation6 + $0xc0] sm:$0xff]
        %v539 = vld [vmem:[#allocation6 + $0xc8] sm:$0xff]
        %v540 = vld [vmem:[#allocation6 + $0xd0] sm:$0xff]
        %v541 = vld [vmem:[#allocation6 + $0xd8] sm:$0xff]
        %v542 = vld [vmem:[#allocation6 + $0xe0] sm:$0xff]
        %v543 = vld [vmem:[#allocation6 + $0xe8] sm:$0xff]
        %v544 = vld [vmem:[#allocation6 + $0xf0] sm:$0xff]
        %v545 = vld [vmem:[#allocation6 + $0xf8] sm:$0xff]
        %v546 = vld [vmem:[%s4] sm:$0x1]
        %v548 = vlaneseq
        %v549 = vshrl.u32 %v548, 7
        %v550 = vsub.s32 0, %v549
        %v551 = vrot.slane %v546, %v550
        %553 = vmatprep.subr.mxu0 0.0
        %554 = vmatpush1.msra.mxu0 %v514
        %555 = vmatprep.subr.mxu0 0.0
        %556 = vmatpush1.msra.mxu0 %v515
        %557 = vmatprep.subr.mxu0 0.0
        %558 = vmatpush1.msra.mxu0 %v516
        %559 = vmatprep.subr.mxu0 0.0
        %560 = vmatpush1.msra.mxu0 %v517
        %561 = vmatprep.subr.mxu0 0.0
        %562 = vmatpush1.msra.mxu0 %v518
        %563 = vmatprep.subr.mxu0 0.0
        %564 = vmatpush1.msra.mxu0 %v519
        %565 = vmatprep.subr.mxu0 0.0
        %566 = vmatpush1.msra.mxu0 %v520
        %567 = vmatprep.subr.mxu0 0.0
        %568 = vmatpush1.msra.mxu0 %v521
        %569 = vmatprep.subr.mxu0 0.0
        %570 = vmatpush1.msra.mxu0 %v522
        %571 = vmatprep.subr.mxu0 0.0
        %572 = vmatpush1.msra.mxu0 %v523
        %573 = vmatprep.subr.mxu0 0.0
        %574 = vmatpush1.msra.mxu0 %v524
        %575 = vmatprep.subr.mxu0 0.0
        %576 = vmatpush1.msra.mxu0 %v525
        %577 = vmatprep.subr.mxu0 0.0
        %578 = vmatpush1.msra.mxu0 %v526
        %579 = vmatprep.subr.mxu0 0.0
        %580 = vmatpush1.msra.mxu0 %v527
        %581 = vmatprep.subr.mxu0 0.0
        %582 = vmatpush1.msra.mxu0 %v528
        %583 = vmatprep.subr.mxu0 0.0
        %584 = vmatpush1.msra.mxu0 %v529
        %585 = vmatprep.subr.mxu0 0.0
        %586 = vmatpush1.msra.mxu0 %v530
        %587 = vmatprep.subr.mxu0 0.0
        %588 = vmatpush1.msra.mxu0 %v531
        %589 = vmatprep.subr.mxu0 0.0
        %590 = vmatpush1.msra.mxu0 %v532
        %591 = vmatprep.subr.mxu0 0.0
        %592 = vmatpush1.msra.mxu0 %v533
        %593 = vmatprep.subr.mxu0 0.0
        %594 = vmatpush1.msra.mxu0 %v534
        %595 = vmatprep.subr.mxu0 0.0
        %596 = vmatpush1.msra.mxu0 %v535
        %597 = vmatprep.subr.mxu0 0.0
        %598 = vmatpush1.msra.mxu0 %v536
        %599 = vmatprep.subr.mxu0 0.0
        %600 = vmatpush1.msra.mxu0 %v537
        %601 = vmatprep.subr.mxu0 0.0
        %602 = vmatpush1.msra.mxu0 %v538
        %603 = vmatprep.subr.mxu0 0.0
        %604 = vmatpush1.msra.mxu0 %v539
        %605 = vmatprep.subr.mxu0 0.0
        %606 = vmatpush1.msra.mxu0 %v540
        %607 = vmatprep.subr.mxu0 0.0
        %608 = vmatpush1.msra.mxu0 %v541
        %609 = vmatprep.subr.mxu0 0.0
        %610 = vmatpush1.msra.mxu0 %v542
        %611 = vmatprep.subr.mxu0 0.0
        %612 = vmatpush1.msra.mxu0 %v543
        %613 = vmatprep.subr.mxu0 0.0
        %614 = vmatpush1.msra.mxu0 %v544
        %615 = vmatprep.subr.mxu0 0.0
        %616 = vmatpush1.msra.mxu0 %v545
        %617 = vmatprep.mubr.f32.mxu0 %v513
        %618 = vmatmul.mubr.f32.gmra.mrb[0].mxu0 %v512
        %v619 = vpop.f32.mrb[0].mxu0
        %v620 = vadd.f32 %v551, %v619
        %v621 = vpop.f32.mrb[0].mxu0
        %622 = vdwg.mxu0
        %v623 = vmax.f32 %v620, 0.0
        %v624 = vld [vmem:[%s5] sm:$0xff]
        %v625 = vld [vmem:[%s5 + $0x8] sm:$0xff]
        %v626 = vld [vmem:[%s5 + $0x10] sm:$0xff]
        %v627 = vld [vmem:[%s5 + $0x18] sm:$0xff]
        %v628 = vld [vmem:[%s5 + $0x20] sm:$0xff]
        %v629 = vld [vmem:[%s5 + $0x28] sm:$0xff]
        %v630 = vld [vmem:[%s5 + $0x30] sm:$0xff]
        %v631 = vld [vmem:[%s5 + $0x38] sm:$0xff]
        %v632 = vld [vmem:[%s5 + $0x40] sm:$0xff]
        %v633 = vld [vmem:[%s5 + $0x48] sm:$0xff]
        %v634 = vld [vmem:[%s5 + $0x50] sm:$0xff]
        %v635 = vld [vmem:[%s5 + $0x58] sm:$0xff]
        %v636 = vld [vmem:[%s5 + $0x60] sm:$0xff]
        %v637 = vld [vmem:[%s5 + $0x68] sm:$0xff]
        %v638 = vld [vmem:[%s5 + $0x70] sm:$0xff]
        %v639 = vld [vmem:[%s5 + $0x78] sm:$0xff]
        %v640 = vld [vmem:[%s6] sm:$0x1]
        %v642 = vlaneseq
        %v643 = vshrl.u32 %v642, 7
        %v644 = vsub.s32 0, %v643
        %v645 = vrot.slane %v640, %v644
        %647 = vmatprep.subr.mxu0 0.0
        %648 = vmatpush1.msra.mxu0 %v624
        %649 = vmatprep.subr.mxu0 0.0
        %650 = vmatpush1.msra.mxu0 %v625
        %651 = vmatprep.subr.mxu0 0.0
        %652 = vmatpush1.msra.mxu0 %v626
        %653 = vmatprep.subr.mxu0 0.0
        %654 = vmatpush1.msra.mxu0 %v627
        %655 = vmatprep.subr.mxu0 0.0
        %656 = vmatpush1.msra.mxu0 %v628
        %657 = vmatprep.subr.mxu0 0.0
        %658 = vmatpush1.msra.mxu0 %v629
        %659 = vmatprep.subr.mxu0 0.0
        %660 = vmatpush1.msra.mxu0 %v630
        %661 = vmatprep.subr.mxu0 0.0
        %662 = vmatpush1.msra.mxu0 %v631
        %663 = vmatprep.subr.mxu0 0.0
        %664 = vmatpush1.msra.mxu0 %v632
        %665 = vmatprep.subr.mxu0 0.0
        %666 = vmatpush1.msra.mxu0 %v633
        %667 = vmatprep.subr.mxu0 0.0
        %668 = vmatpush1.msra.mxu0 %v634
        %669 = vmatprep.subr.mxu0 0.0
        %670 = vmatpush1.msra.mxu0 %v635
        %671 = vmatprep.subr.mxu0 0.0
        %672 = vmatpush1.msra.mxu0 %v636
        %673 = vmatprep.subr.mxu0 0.0
        %674 = vmatpush1.msra.mxu0 %v637
        %675 = vmatprep.subr.mxu0 0.0
        %676 = vmatpush1.msra.mxu0 %v638
        %677 = vmatprep.subr.mxu0 0.0
        %678 = vmatpush1.msra.mxu0 %v639
        %679 = vmatprep.subr.mxu0 0.0
        %680 = vmatpush1.msra.mxu0 0.0
        %681 = vmatprep.subr.mxu0 0.0
        %682 = vmatpush1.msra.mxu0 0.0
        %683 = vmatprep.subr.mxu0 0.0
        %684 = vmatpush1.msra.mxu0 0.0
        %685 = vmatprep.subr.mxu0 0.0
        %686 = vmatpush1.msra.mxu0 0.0
        %687 = vmatprep.subr.mxu0 0.0
        %688 = vmatpush1.msra.mxu0 0.0
        %689 = vmatprep.subr.mxu0 0.0
        %690 = vmatpush1.msra.mxu0 0.0
        %691 = vmatprep.subr.mxu0 0.0
        %692 = vmatpush1.msra.mxu0 0.0
        %693 = vmatprep.subr.mxu0 0.0
        %694 = vmatpush1.msra.mxu0 0.0
        %695 = vmatprep.subr.mxu0 0.0
        %696 = vmatpush1.msra.mxu0 0.0
        %697 = vmatprep.subr.mxu0 0.0
        %698 = vmatpush1.msra.mxu0 0.0
        %699 = vmatprep.subr.mxu0 0.0
        %700 = vmatpush1.msra.mxu0 0.0
        %701 = vmatprep.subr.mxu0 0.0
        %702 = vmatpush1.msra.mxu0 0.0
        %703 = vmatprep.subr.mxu0 0.0
        %704 = vmatpush1.msra.mxu0 0.0
        %705 = vmatprep.subr.mxu0 0.0
        %706 = vmatpush1.msra.mxu0 0.0
        %707 = vmatprep.subr.mxu0 0.0
        %708 = vmatpush1.msra.mxu0 0.0
        %709 = vmatprep.subr.mxu0 0.0
        %710 = vmatpush1.msra.mxu0 0.0
        %711 = vmatprep.mubr.f32.mxu0 0.0
        %712 = vmatmul.mubr.f32.gmra.mrb[0].mxu0 %v623
        %v713 = vpop.f32.mrb[0].mxu0
        %v714 = vadd.f32 %v645, %v713
        %v715 = vpop.f32.mrb[0].mxu0
        %716 = vdwg.mxu0
        %v717 = vmax.f32 %v714, 0.0
        %v718 = vld [vmem:[%s7] sm:$0xff]
        %v719 = vld [vmem:[#allocation2] sm:$0x1]
        %v721 = vlaneseq
        %v722 = vshrl.u32 %v721, 7
        %v723 = vsub.s32 0, %v722
        %v724 = vrot.slane %v719, %v723
        %725 = vset.pattern.permute.xlu0 0
        %726 = vperm.xlu0 %725, %v724
        %v727 = vpop.permute.xlu0 %726
        %vm729 = vcmask 523264
        %v731 = vsel %vm729, %v718, 0
        %v734 = vsel %vm729, %v717, 0
        %736 = vmatprep.subr.mxu0 0.0
        %737 = vmatpush1.xpose.msra.mxu0 %v734
        %738 = vmatprep.subr.mxu0 0.0
        %739 = vmatpush1.xpose.msra.mxu0 0.0
        %740 = vmatprep.subr.mxu0 0.0
        %741 = vmatpush1.xpose.msra.mxu0 0.0
        %742 = vmatprep.subr.mxu0 0.0
        %743 = vmatpush1.xpose.msra.mxu0 0.0
        %744 = vmatprep.subr.mxu0 0.0
        %745 = vmatpush1.xpose.msra.mxu0 0.0
        %746 = vmatprep.subr.mxu0 0.0
        %747 = vmatpush1.xpose.msra.mxu0 0.0
        %748 = vmatprep.subr.mxu0 0.0
        %749 = vmatpush1.xpose.msra.mxu0 0.0
        %750 = vmatprep.subr.mxu0 0.0
        %751 = vmatpush1.xpose.msra.mxu0 0.0
        %752 = vmatprep.subr.mxu0 0.0
        %753 = vmatpush1.xpose.msra.mxu0 0.0
        %754 = vmatprep.subr.mxu0 0.0
        %755 = vmatpush1.xpose.msra.mxu0 0.0
        %756 = vmatprep.subr.mxu0 0.0
        %757 = vmatpush1.xpose.msra.mxu0 0.0
        %758 = vmatprep.subr.mxu0 0.0
        %759 = vmatpush1.xpose.msra.mxu0 0.0
        %760 = vmatprep.subr.mxu0 0.0
        %761 = vmatpush1.xpose.msra.mxu0 0.0
        %762 = vmatprep.subr.mxu0 0.0
        %763 = vmatpush1.xpose.msra.mxu0 0.0
        %764 = vmatprep.subr.mxu0 0.0
        %765 = vmatpush1.xpose.msra.mxu0 0.0
        %766 = vmatprep.subr.mxu0 0.0
        %767 = vmatpush1.xpose.msra.mxu0 0.0
        %768 = vmatprep.subr.mxu0 0.0
        %769 = vmatpush1.xpose.msra.mxu0 0.0
        %770 = vmatprep.subr.mxu0 0.0
        %771 = vmatpush1.xpose.msra.mxu0 0.0
        %772 = vmatprep.subr.mxu0 0.0
        %773 = vmatpush1.xpose.msra.mxu0 0.0
        %774 = vmatprep.subr.mxu0 0.0
        %775 = vmatpush1.xpose.msra.mxu0 0.0
        %776 = vmatprep.subr.mxu0 0.0
        %777 = vmatpush1.xpose.msra.mxu0 0.0
        %778 = vmatprep.subr.mxu0 0.0
        %779 = vmatpush1.xpose.msra.mxu0 0.0
        %780 = vmatprep.subr.mxu0 0.0
        %781 = vmatpush1.xpose.msra.mxu0 0.0
        %782 = vmatprep.subr.mxu0 0.0
        %783 = vmatpush1.xpose.msra.mxu0 0.0
        %784 = vmatprep.subr.mxu0 0.0
        %785 = vmatpush1.xpose.msra.mxu0 0.0
        %786 = vmatprep.subr.mxu0 0.0
        %787 = vmatpush1.xpose.msra.mxu0 0.0
        %788 = vmatprep.subr.mxu0 0.0
        %789 = vmatpush1.xpose.msra.mxu0 0.0
        %790 = vmatprep.subr.mxu0 0.0
        %791 = vmatpush1.xpose.msra.mxu0 0.0
        %792 = vmatprep.subr.mxu0 0.0
        %793 = vmatpush1.xpose.msra.mxu0 0.0
        %794 = vmatprep.subr.mxu0 0.0
        %795 = vmatpush1.xpose.msra.mxu0 0.0
        %796 = vmatprep.subr.mxu0 0.0
        %797 = vmatpush1.xpose.msra.mxu0 0.0
        %798 = vmatprep.subr.mxu0 0.0
        %799 = vmatpush1.xpose.msra.mxu0 0.0
        %800 = vmatprep.mubr.f32.mxu0 0.0
        %801 = vmatmul.mubr.f32.gmra.mrb[0].mxu0 %v731
        %v802 = vpop.f32.mrb[0].mxu0
        %v803 = vadd.f32 %v727, %v802
        %v804 = vpop.f32.mrb[0].mxu0
        %805 = vdwg.mxu0
        %v806 = vxor.u32 %v803, 2147483648
        %v807 = vmul.f32 %v806, 1.442695
        %v808 = vpow.pop %v807
        %v809 = vadd.f32 %v808, 1.0
        %v810 = vrcp.pop %v809
        %v811 = vmul.f32 1.0, %v810
        %vm812 = vcmask 64512
        %813 = vst.msk [vmem:[%s357] sm:$0xff] %vm812, %v811
        %s814 = sand.u32 %s229, 1
        %s815 = scalar_lea.sflag [#allocation5], %s814
        %s816 = sand.u32 %s229, 1
        %s817 = smul.addr %s816, 8
        %s818 = scalar_lea.vmem [#allocation8], %s817
        // Predicated region
        $region65: #{tpu_custom_call.1} parent=55 // pred_check
          %p819 = pneg %p239
        $region66: #{tpu_custom_call.1} parent=55 // pred_check_branch
          %821 = sbr.rel (%p819) target = $region68
        $region67: #{tpu_custom_call.1} parent=55 // pred_region
          %s823 = ssub.s32 128, 128
          %824 = vsyncadd %s815, %s823
          %s825 = smul.addr %s27, 128
          %s826 = scalar_lea.hbm %s9, %s825
          %s828 = sshll.u32 %s818, 4
          %s829 = int_to_ptr.vmem [resolvable:$true] %s828
          %831 = dma.vmem_to_hbm [thread:$0]  %s829, 128, %s826, %s815
        $region68: #{tpu_custom_call.1} parent=55 // pred_fallthru
          _
      $region56: #{tpu_custom_call.1} parent=5 // pred_fallthru
        _
      %p832 = scmp.le.s32.totalorder 2, %s22
      // Predicated region
      $region69: #{tpu_custom_call.1} parent=5 // pred_check
        %p833 = pneg %p832
      $region70: #{tpu_custom_call.1} parent=5 // pred_check_branch
        %835 = sbr.rel (%p833) target = $region72
      $region71: #{tpu_custom_call.1} parent=5 // pred_region
        %s836 = ssub.s32 %s22, 2
        // Predicated region
        $region73: #{tpu_custom_call.1} parent=71 // pred_check
          %p837 = pneg %p245
        $region74: #{tpu_custom_call.1} parent=71 // pred_check_branch
          %839 = sbr.rel (%p837) target = $region76
        $region75: #{tpu_custom_call.1} parent=71 // pred_region
          %s840 = sand.u32 %s230, 1
          %s841 = scalar_lea.sflag [#allocation5], %s840
          %s842 = sand.u32 %s230, 1
          %s843 = smul.addr %s842, 8
          %s844 = scalar_lea.vmem [#allocation8], %s843
          %845 = dma.done %s841, 128
        $region76: #{tpu_custom_call.1} parent=71 // pred_fallthru
          _
      $region72: #{tpu_custom_call.1} parent=5 // pred_fallthru
        _
    $region6: #{tpu_custom_call.1} parent=1 // loop_footer
      %s26 = sadd.s32 1, %s22
    $region7: #{tpu_custom_call.1} parent=1 // loop_footer_branch
      %21 = sbr.rel target = $region3
    $region8: #{tpu_custom_call.1} parent=1 // loop_exit
      _
    %846 = vsyncpa [#allocation4], 1
    %s847 = scalar_lea.sflag [#allocation4], 1
    %848 = vsyncpa %s847, 1
    %849 = vsyncpa [#allocation7], 1
    %850 = vsyncpa [#allocation5], 1
    %s851 = scalar_lea.sflag [#allocation5], 1
    %852 = vsyncpa %s851, 1

</llo_original>
